<compile_context>
chip_gen: v5e
topology: v5e:2x2
jax: 0.10.0
libtpu: 0.0.40
codegen_flags: <defaults>
</compile_context>

<pallas_src>
import jax
import jax.numpy as jnp
from jax.experimental import pallas as pl
from jax.experimental.pallas import tpu as pltpu


def _round_up(x, m):
    return ((x + m - 1) // m) * m


def _vmem_capacity_bytes():
    """Physical VMEM of the local TPU; conservative v7x-sized fallback."""
    try:
        cap = getattr(pltpu.get_tpu_info(), "vmem_capacity_bytes", None)
        if cap:
            return int(cap)
    except Exception:
        pass
    return 64 * 1024 * 1024


def _pick_tiling(n, f, c_pad, vmem_cap):
    """Pick (tm, n_pad): streamed working set <= ~70% of VMEM and, when the
    graph is big enough, >= 2 row tiles so both v7x TensorCores get work."""
    budget = int(0.70 * vmem_cap)
    n16 = _round_up(max(n, 16), 16)
    max_tm = 512 if vmem_cap >= (100 << 20) else 256   # v5e/v6e: bigger tiles
    tm = 16
    for cand in (512, 256, 128, 64, 32, 16):
        if cand > max_tm or cand > n16:
            continue
        n_pad_c = _round_up(n16, cand)
        work = (2 * cand * n_pad_c * 2      # A_hat row slab, double-buffered, bf16
                + 2 * n_pad_c * f * 2       # resident X (Pallas double-buffers)
                + 2 * cand * c_pad * 2      # output tile, double-buffered, bf16
                + (1 << 20))                # weights + Mosaic internal scratch
        if work <= budget:
            tm = cand
            break
    n_pad = _round_up(n16, tm)
    if n_pad // tm < 2 and tm > 16:         # megacore: keep both TCs busy (v7x)
        tm = max(16, _round_up(tm // 2, 16))
        n_pad = _round_up(n16, tm)
    return tm, n_pad


def _pad2(a, rows, cols, dtype):
    """Cast + pad (fast path: pure astype when no padding is needed)."""
    a = a.astype(dtype)
    pr, pc = rows - a.shape[0], cols - a.shape[1]
    if pr or pc:
        a = jnp.pad(a, ((0, pr), (0, pc)))
    return a


# ----------------------------------------------------------------------------
# Kernel
# ----------------------------------------------------------------------------
def _snet_row_kernel(ahat_ref, x_ref,
                     w1_ref, b1_ref, w2_ref, b2_ref, w3_ref, b3_ref,
                     w4_ref, b4_ref, out_ref):
    # GCNConv, reassociated as (A_slab @ X) @ W1 + b1.
    ax = jnp.dot(ahat_ref[...], x_ref[...], preferred_element_type=jnp.float32)
    h = jnp.dot(ax.astype(jnp.bfloat16), w1_ref[...],
                preferred_element_type=jnp.float32) + b1_ref[...]
    h = jnp.maximum(h, 0.0)                        # relu1 (drop1: identity, eval)

    # lin1: 64 -> 32
    h = jnp.dot(h.astype(jnp.bfloat16), w2_ref[...],
                preferred_element_type=jnp.float32) + b2_ref[...]
    h = jnp.maximum(h, 0.0)                        # relu2 (drop1: identity, eval)

    # lin2: 32 -> 16
    h = jnp.dot(h.astype(jnp.bfloat16), w3_ref[...],
                preferred_element_type=jnp.float32) + b3_ref[...]
    h = jnp.maximum(h, 0.0)                        # relu3 (drop1: identity, eval)

    # lin3: 16 -> C_pad (lane-dense, zero-padded columns), bf16 writeback.
    out = jnp.dot(h.astype(jnp.bfloat16), w4_ref[...],
                  preferred_element_type=jnp.float32) + b4_ref[...]
    out_ref[...] = out.astype(out_ref.dtype)


# ----------------------------------------------------------------------------
# Wrapper
# ----------------------------------------------------------------------------
def snet_forward(ahat, x, params):
    """Row-tiled Pallas forward.  ahat: (N, N) f32, x: (N, F) f32."""
    w1, b1, w2, b2, w3, b3, w4, b4 = params
    n, f = x.shape
    n_classes = w4.shape[1]
    c_pad = _round_up(max(n_classes, 128), 128)    # lane-dense output store

    vmem_cap = _vmem_capacity_bytes()
    tm, n_pad = _pick_tiling(n, f, c_pad, vmem_cap)
    n_tiles = n_pad // tm
    vmem_limit = int(0.75 * vmem_cap)

    # Operand prep: single astype (+ pad only when needed).
    ahat_p = _pad2(ahat, n_pad, n_pad, jnp.bfloat16)
    x_p = _pad2(x, n_pad, f, jnp.bfloat16)
    w1_b = w1.astype(jnp.bfloat16)
    w2_b = w2.astype(jnp.bfloat16)
    w3_b = w3.astype(jnp.bfloat16)
    w4_p = _pad2(w4, w4.shape[0], c_pad, jnp.bfloat16)
    b4_p = _pad2(b4, 1, c_pad, jnp.float32)

    flops = (2 * n_pad * n_pad * f
             + 2 * n_pad * (f * 64 + 64 * 32 + 32 * 16 + 16 * c_pad))
    bytes_accessed = (2 * n_pad * n_pad            # bf16 A_hat (streamed once)
                      + 2 * n_pad * f              # bf16 X (resident, read once)
                      + 2 * n_pad * c_pad          # bf16 output
                      + 2 * (f * 64 + 64 * 32 + 32 * 16 + 16 * c_pad)
                      + 4 * (64 + 32 + 16 + c_pad))
    cost = pl.CostEstimate(flops=int(flops), transcendentals=0,
                           bytes_accessed=int(bytes_accessed))

    out_pad = pl.pallas_call(
        _snet_row_kernel,
        out_shape=jax.ShapeDtypeStruct((n_pad, c_pad), jnp.bfloat16),
        grid=(n_tiles,),
        in_specs=[
            pl.BlockSpec((tm, n_pad), lambda i: (i, 0)),   # A_hat row slab
            pl.BlockSpec((n_pad, f), lambda i: (0, 0)),    # X (resident)
            pl.BlockSpec((f, 64), lambda i: (0, 0)),       # w1
            pl.BlockSpec((1, 64), lambda i: (0, 0)),       # b1
            pl.BlockSpec((64, 32), lambda i: (0, 0)),      # w2
            pl.BlockSpec((1, 32), lambda i: (0, 0)),       # b2
            pl.BlockSpec((32, 16), lambda i: (0, 0)),      # w3
            pl.BlockSpec((1, 16), lambda i: (0, 0)),       # b3
            pl.BlockSpec((16, c_pad), lambda i: (0, 0)),   # w4 (padded lanes)
            pl.BlockSpec((1, c_pad), lambda i: (0, 0)),    # b4 (padded lanes)
        ],
        out_specs=pl.BlockSpec((tm, c_pad), lambda i: (i, 0)),
        compiler_params=pltpu.CompilerParams(
            dimension_semantics=("parallel",),
            vmem_limit_bytes=vmem_limit),
        cost_estimate=cost,
    )(ahat_p, x_p, w1_b, b1, w2_b, b2, w3_b, b3, w4_p, b4_p)

    return out_pad[:n, :n_classes].astype(jnp.float32)


# ----------------------------------------------------------------------------
# Glue: dense normalized adjacency + parameter init (plain JAX)
# ----------------------------------------------------------------------------
def build_normalized_adjacency(edge_index, n_nodes):
    """Dense A_hat following PyG gcn_norm semantics on a (possibly uncoalesced,
    directed) edge_index: edge multiplicities count toward the degree, self
    loops are added only where missing, then D^{-1/2} (A+I) D^{-1/2}."""
    src, dst = edge_index[0], edge_index[1]
    adj = jnp.zeros((n_nodes, n_nodes), jnp.float32)
    adj = adj.at[dst, src].add(1.0)                      # edge j -> i, multiplicity
    diag = jnp.diagonal(adj)
    adj = adj + jnp.diag(jnp.where(diag == 0, 1.0, 0.0))  # add_remaining_self_loops
    deg = adj.sum(axis=1)
    d_inv_sqrt = jnp.where(deg > 0, jax.lax.rsqrt(deg), 0.0)
    return adj * d_inv_sqrt[:, None] * d_inv_sqrt[None, :]


def init_params(key, num_features, num_classes):
    """Deterministic uniform init (Kaiming-uniform-style bounds, like nn.Linear)."""
    dims = [(num_features, 64), (64, 32), (32, 16), (16, num_classes)]
    params = []
    for (fan_in, fan_out) in dims:
        key, kw, kb = jax.random.split(key, 3)
        bound = 1.0 / jnp.sqrt(jnp.float32(fan_in))
        w = jax.random.uniform(kw, (fan_in, fan_out), jnp.float32, -bound, bound)
        b = jax.random.uniform(kb, (1, fan_out), jnp.float32, -bound, bound)
        params += [w, b]
    return tuple(params)


if __name__ == "__main__":
    # Small synthetic graph consistent with the module's forward:
    #   N nodes, num_features input dims, num_classes outputs.
    N_NODES = 64
    NUM_FEATURES = 16
    NUM_CLASSES = 8
    N_EDGES = 128

    key = jax.random.PRNGKey(0)
    k_x, k_e, k_p = jax.random.split(key, 3)

    x = jax.random.normal(k_x, (N_NODES, NUM_FEATURES), jnp.float32)
    edge_index = jax.random.randint(k_e, (2, N_EDGES), 0, N_NODES, jnp.int32)

    ahat = build_normalized_adjacency(edge_index, N_NODES)
    params = init_params(k_p, NUM_FEATURES, NUM_CLASSES)

    out = snet_forward(ahat, x, params)
    out = jax.block_until_ready(out)

    # Pure-JAX f32 reference (same math, outside Pallas).  Kernel runs bf16
    # operands with f32 accumulation, so use a slightly looser tolerance.
    w1, b1, w2, b2, w3, b3, w4, b4 = params
    ref = ahat @ (x @ w1) + b1
    ref = jnp.maximum(ref, 0.0)
    ref = jnp.maximum(ref @ w2 + b2, 0.0)
    ref = jnp.maximum(ref @ w3 + b3, 0.0)
    ref = ref @ w4 + b4

    assert out.shape == (N_NODES, NUM_CLASSES)
    assert jnp.allclose(out, ref, atol=5e-2, rtol=5e-2), (
        float(jnp.max(jnp.abs(out - ref))))

    print("KERNEL_OK")
</pallas_src>

<mosaic_0001>
module attributes {stable_mosaic.version = 11 : i64} {
  func.func @_snet_row_kernel(%arg0: i32, %arg1: memref<32x64xbf16, #tpu.memory_space<vmem>>, %arg2: memref<64x16xbf16, #tpu.memory_space<vmem>>, %arg3: memref<16x64xbf16, #tpu.memory_space<vmem>>, %arg4: memref<1x64xf32, #tpu.memory_space<vmem>>, %arg5: memref<64x32xbf16, #tpu.memory_space<vmem>>, %arg6: memref<1x32xf32, #tpu.memory_space<vmem>>, %arg7: memref<32x16xbf16, #tpu.memory_space<vmem>>, %arg8: memref<1x16xf32, #tpu.memory_space<vmem>>, %arg9: memref<16x128xbf16, #tpu.memory_space<vmem>>, %arg10: memref<1x128xf32, #tpu.memory_space<vmem>>, %arg11: memref<32x128xbf16, #tpu.memory_space<vmem>>) attributes {dimension_semantics = [#tpu.dimension_semantics<parallel>], iteration_bounds = array<i64: 2>, scalar_prefetch = 0 : i64, scratch_operands = 0 : i64, tpu.core_type = #tpu.core_type<tc>, window_params = [{transform_indices = @transform_0, window_bounds = array<i64: 32, 64>}, {pipeline_mode = #tpu.pipeline_mode<synchronous>, transform_indices = @transform_1, window_bounds = array<i64: 64, 16>}, {pipeline_mode = #tpu.pipeline_mode<synchronous>, transform_indices = @transform_2, window_bounds = array<i64: 16, 64>}, {pipeline_mode = #tpu.pipeline_mode<synchronous>, transform_indices = @transform_3, window_bounds = array<i64: 1, 64>}, {pipeline_mode = #tpu.pipeline_mode<synchronous>, transform_indices = @transform_4, window_bounds = array<i64: 64, 32>}, {pipeline_mode = #tpu.pipeline_mode<synchronous>, transform_indices = @transform_5, window_bounds = array<i64: 1, 32>}, {pipeline_mode = #tpu.pipeline_mode<synchronous>, transform_indices = @transform_6, window_bounds = array<i64: 32, 16>}, {pipeline_mode = #tpu.pipeline_mode<synchronous>, transform_indices = @transform_7, window_bounds = array<i64: 1, 16>}, {pipeline_mode = #tpu.pipeline_mode<synchronous>, transform_indices = @transform_8, window_bounds = array<i64: 16, 128>}, {pipeline_mode = #tpu.pipeline_mode<synchronous>, transform_indices = @transform_9, window_bounds = array<i64: 1, 128>}, {transform_indices = @transform_10, window_bounds = array<i64: 32, 128>}]} {
    %c0 = arith.constant 0 : index
    %c0_0 = arith.constant 0 : index
    %0 = vector.load %arg1[%c0, %c0_0] : memref<32x64xbf16, #tpu.memory_space<vmem>>, vector<32x64xbf16>
    %c0_1 = arith.constant 0 : index
    %c0_2 = arith.constant 0 : index
    %1 = vector.load %arg2[%c0_1, %c0_2] : memref<64x16xbf16, #tpu.memory_space<vmem>>, vector<64x16xbf16>
    %cst = arith.constant dense<0.000000e+00> : vector<32x16xf32>
    %2 = tpu.matmul %0, %1, %cst {dimension_numbers = #tpu.dot_dimension_numbers<[1], [0], [0], [1], [0, 0, 1, 1], [], []>} : vector<32x64xbf16>, vector<64x16xbf16>, vector<32x16xf32> -> vector<32x16xf32>
    %3 = arith.truncf %2 : vector<32x16xf32> to vector<32x16xbf16>
    %c0_3 = arith.constant 0 : index
    %c0_4 = arith.constant 0 : index
    %4 = vector.load %arg3[%c0_3, %c0_4] : memref<16x64xbf16, #tpu.memory_space<vmem>>, vector<16x64xbf16>
    %cst_5 = arith.constant dense<0.000000e+00> : vector<32x64xf32>
    %5 = tpu.matmul %3, %4, %cst_5 {dimension_numbers = #tpu.dot_dimension_numbers<[1], [0], [0], [1], [0, 0, 1, 1], [], []>} : vector<32x16xbf16>, vector<16x64xbf16>, vector<32x64xf32> -> vector<32x64xf32>
    %c0_6 = arith.constant 0 : index
    %c0_7 = arith.constant 0 : index
    %6 = vector.load %arg4[%c0_6, %c0_7] : memref<1x64xf32, #tpu.memory_space<vmem>>, vector<1x64xf32>
    %7 = vector.broadcast %6 : vector<1x64xf32> to vector<32x64xf32>
    %8 = arith.addf %5, %7 : vector<32x64xf32>
    %cst_8 = arith.constant 0.000000e+00 : f32
    %9 = vector.broadcast %cst_8 : f32 to vector<32x64xf32>
    %10 = arith.maximumf %8, %9 : vector<32x64xf32>
    %11 = arith.truncf %10 : vector<32x64xf32> to vector<32x64xbf16>
    %c0_9 = arith.constant 0 : index
    %c0_10 = arith.constant 0 : index
    %12 = vector.load %arg5[%c0_9, %c0_10] : memref<64x32xbf16, #tpu.memory_space<vmem>>, vector<64x32xbf16>
    %cst_11 = arith.constant dense<0.000000e+00> : vector<32x32xf32>
    %13 = tpu.matmul %11, %12, %cst_11 {dimension_numbers = #tpu.dot_dimension_numbers<[1], [0], [0], [1], [0, 0, 1, 1], [], []>} : vector<32x64xbf16>, vector<64x32xbf16>, vector<32x32xf32> -> vector<32x32xf32>
    %c0_12 = arith.constant 0 : index
    %c0_13 = arith.constant 0 : index
    %14 = vector.load %arg6[%c0_12, %c0_13] : memref<1x32xf32, #tpu.memory_space<vmem>>, vector<1x32xf32>
    %15 = vector.broadcast %14 : vector<1x32xf32> to vector<32x32xf32>
    %16 = arith.addf %13, %15 : vector<32x32xf32>
    %cst_14 = arith.constant 0.000000e+00 : f32
    %17 = vector.broadcast %cst_14 : f32 to vector<32x32xf32>
    %18 = arith.maximumf %16, %17 : vector<32x32xf32>
    %19 = arith.truncf %18 : vector<32x32xf32> to vector<32x32xbf16>
    %c0_15 = arith.constant 0 : index
    %c0_16 = arith.constant 0 : index
    %20 = vector.load %arg7[%c0_15, %c0_16] : memref<32x16xbf16, #tpu.memory_space<vmem>>, vector<32x16xbf16>
    %cst_17 = arith.constant dense<0.000000e+00> : vector<32x16xf32>
    %21 = tpu.matmul %19, %20, %cst_17 {dimension_numbers = #tpu.dot_dimension_numbers<[1], [0], [0], [1], [0, 0, 1, 1], [], []>} : vector<32x32xbf16>, vector<32x16xbf16>, vector<32x16xf32> -> vector<32x16xf32>
    %c0_18 = arith.constant 0 : index
    %c0_19 = arith.constant 0 : index
    %22 = vector.load %arg8[%c0_18, %c0_19] : memref<1x16xf32, #tpu.memory_space<vmem>>, vector<1x16xf32>
    %23 = vector.broadcast %22 : vector<1x16xf32> to vector<32x16xf32>
    %24 = arith.addf %21, %23 : vector<32x16xf32>
    %cst_20 = arith.constant 0.000000e+00 : f32
    %25 = vector.broadcast %cst_20 : f32 to vector<32x16xf32>
    %26 = arith.maximumf %24, %25 : vector<32x16xf32>
    %27 = arith.truncf %26 : vector<32x16xf32> to vector<32x16xbf16>
    %c0_21 = arith.constant 0 : index
    %c0_22 = arith.constant 0 : index
    %28 = vector.load %arg9[%c0_21, %c0_22] : memref<16x128xbf16, #tpu.memory_space<vmem>>, vector<16x128xbf16>
    %cst_23 = arith.constant dense<0.000000e+00> : vector<32x128xf32>
    %29 = tpu.matmul %27, %28, %cst_23 {dimension_numbers = #tpu.dot_dimension_numbers<[1], [0], [0], [1], [0, 0, 1, 1], [], []>} : vector<32x16xbf16>, vector<16x128xbf16>, vector<32x128xf32> -> vector<32x128xf32>
    %c0_24 = arith.constant 0 : index
    %c0_25 = arith.constant 0 : index
    %30 = vector.load %arg10[%c0_24, %c0_25] : memref<1x128xf32, #tpu.memory_space<vmem>>, vector<1x128xf32>
    %31 = vector.broadcast %30 : vector<1x128xf32> to vector<32x128xf32>
    %32 = arith.addf %29, %31 : vector<32x128xf32>
    %33 = arith.truncf %32 : vector<32x128xf32> to vector<32x128xbf16>
    %c0_26 = arith.constant 0 : index
    %c0_27 = arith.constant 0 : index
    %34 = vector.load %arg11[%c0_26, %c0_27] : memref<32x128xbf16, #tpu.memory_space<vmem>>, vector<32x128xbf16>
    tpu.vector_store %arg11[%c0_26, %c0_27], %33 {strides = array<i32>} : memref<32x128xbf16, #tpu.memory_space<vmem>>, vector<32x128xbf16>,
    return
  }
  func.func @transform_0(%arg0: i32) -> (i32, i32) {
    %c0_i32 = arith.constant 0 : i32
    %c0_i32_0 = arith.constant 0 : i32
    return %arg0, %c0_i32 : i32, i32
  }
  func.func @transform_1(%arg0: i32) -> (i32, i32) {
    %c0_i32 = arith.constant 0 : i32
    %c0_i32_0 = arith.constant 0 : i32
    %c0_i32_1 = arith.constant 0 : i32
    return %c0_i32, %c0_i32_0 : i32, i32
  }
  func.func @transform_2(%arg0: i32) -> (i32, i32) {
    %c0_i32 = arith.constant 0 : i32
    %c0_i32_0 = arith.constant 0 : i32
    %c0_i32_1 = arith.constant 0 : i32
    return %c0_i32, %c0_i32_0 : i32, i32
  }
  func.func @transform_3(%arg0: i32) -> (i32, i32) {
    %c0_i32 = arith.constant 0 : i32
    %c0_i32_0 = arith.constant 0 : i32
    %c0_i32_1 = arith.constant 0 : i32
    return %c0_i32, %c0_i32_0 : i32, i32
  }
  func.func @transform_4(%arg0: i32) -> (i32, i32) {
    %c0_i32 = arith.constant 0 : i32
    %c0_i32_0 = arith.constant 0 : i32
    %c0_i32_1 = arith.constant 0 : i32
    return %c0_i32, %c0_i32_0 : i32, i32
  }
  func.func @transform_5(%arg0: i32) -> (i32, i32) {
    %c0_i32 = arith.constant 0 : i32
    %c0_i32_0 = arith.constant 0 : i32
    %c0_i32_1 = arith.constant 0 : i32
    return %c0_i32, %c0_i32_0 : i32, i32
  }
  func.func @transform_6(%arg0: i32) -> (i32, i32) {
    %c0_i32 = arith.constant 0 : i32
    %c0_i32_0 = arith.constant 0 : i32
    %c0_i32_1 = arith.constant 0 : i32
    return %c0_i32, %c0_i32_0 : i32, i32
  }
  func.func @transform_7(%arg0: i32) -> (i32, i32) {
    %c0_i32 = arith.constant 0 : i32
    %c0_i32_0 = arith.constant 0 : i32
    %c0_i32_1 = arith.constant 0 : i32
    return %c0_i32, %c0_i32_0 : i32, i32
  }
  func.func @transform_8(%arg0: i32) -> (i32, i32) {
    %c0_i32 = arith.constant 0 : i32
    %c0_i32_0 = arith.constant 0 : i32
    %c0_i32_1 = arith.constant 0 : i32
    return %c0_i32, %c0_i32_0 : i32, i32
  }
  func.func @transform_9(%arg0: i32) -> (i32, i32) {
    %c0_i32 = arith.constant 0 : i32
    %c0_i32_0 = arith.constant 0 : i32
    %c0_i32_1 = arith.constant 0 : i32
    return %c0_i32, %c0_i32_0 : i32, i32
  }
  func.func @transform_10(%arg0: i32) -> (i32, i32) {
    %c0_i32 = arith.constant 0 : i32
    %c0_i32_0 = arith.constant 0 : i32
    return %arg0, %c0_i32 : i32, i32
  }
}

</mosaic_0001>

<llo_original>
// kernel: tpu_custom_call.1
$region0: #{tpu_custom_call.1}
  #allocation0 [shape = 'u32[]', space=smem, size = 0x4, offset = 0x4, fixed_abs, tag = 'smem constant byte address 0x4 - core index']
  #allocation1 [shape = 'u32[72,128]{1,0:T(1,128)}', space=vmem, size = 0x9000, scoped, tag = 'internal scratch']
  %s0 = inlined_call_operand.vmem [shape: bf16[64,64], index: 0, kind: input, shape index: {}]
  %s1 = inlined_call_operand.vmem [shape: bf16[64,16], index: 1, kind: input, shape index: {}]
  %s2 = inlined_call_operand.vmem [shape: bf16[16,64], index: 2, kind: input, shape index: {}]
  %s3 = inlined_call_operand.vmem [shape: f32[1,64], index: 3, kind: input, shape index: {}]
  %s4 = inlined_call_operand.vmem [shape: bf16[64,32], index: 4, kind: input, shape index: {}]
  %s5 = inlined_call_operand.vmem [shape: f32[1,32], index: 5, kind: input, shape index: {}]
  %s6 = inlined_call_operand.vmem [shape: bf16[32,16], index: 6, kind: input, shape index: {}]
  %s7 = inlined_call_operand.vmem [shape: f32[1,16], index: 7, kind: input, shape index: {}]
  %s8 = inlined_call_operand.vmem [shape: bf16[16,128], index: 8, kind: input, shape index: {}]
  %s9 = inlined_call_operand.vmem [shape: f32[1,128], index: 9, kind: input, shape index: {}]
  %s10 = inlined_call_operand.hbm [shape: bf16[64,128], index: 10, kind: output, shape index: {}]
  %s11 = sld [smem:[#allocation0]]
  $region73: #{tpu_custom_call.1} parent=0
    _
  %s13 = ssub.s32 1, %s11
  %s14 = scalar_select 0, %s13, %s11
  $region1: #{tpu_custom_call.1} parent=0
    #allocation2 [shape = 'u8[16384]{0}', space=vmem, size = 0x4000, scoped, tag = 'output window, operand 0']
    #allocation3 [shape = 's32[2]{0}', space=sflag, size = 0x8, scoped, tag = 'scoped memory for tpu_custom_call.1']
    %15 = vsyncpa [#allocation3], 0
    %s16 = scalar_lea.sflag [#allocation3], 1
    %17 = vsyncpa %s16, 0
    loop: start=0, step=1, limit=4
    $region2: #{tpu_custom_call.1} parent=1 // loop_pre_header
      _
    $region3: #{tpu_custom_call.1} parent=1 // loop_header
      %s19 = sphi 0, %s23
      %p20 = scmp.ge.s32.totalorder %s19, 4
      %s29 = sphi 0, %s31
      %s32 = sphi 0, %s29
      %s33 = sphi 0, %s32
      %s49 = sphi 0, %s33
      %s53 = sphi 0, %s53
      %s55 = sphi 0, %s53
      %s56 = sphi 0, %s55
      %s70 = sphi 0, %s56
      %s74 = sphi 0, %s74
      %s76 = sphi 0, %s74
      %s77 = sphi 0, %s76
      %s91 = sphi 0, %s77
      %s95 = sphi 0, %s95
      %s97 = sphi 0, %s95
      %s98 = sphi 0, %s97
      %s112 = sphi 0, %s98
      %s116 = sphi 0, %s116
      %s118 = sphi 0, %s116
      %s119 = sphi 0, %s118
      %s133 = sphi 0, %s119
      %s137 = sphi 0, %s137
      %s139 = sphi 0, %s137
      %s140 = sphi 0, %s139
      %s154 = sphi 0, %s140
      %s158 = sphi 0, %s158
      %s160 = sphi 0, %s158
      %s161 = sphi 0, %s160
      %s175 = sphi 0, %s161
      %s179 = sphi 0, %s179
      %s181 = sphi 0, %s179
      %s182 = sphi 0, %s181
      %s196 = sphi 0, %s182
      %s200 = sphi 0, %s200
      %s202 = sphi 0, %s200
      %s203 = sphi 0, %s202
      %s217 = sphi 0, %s203
      %s221 = sphi 0, %s221
      %s223 = sphi 0, %s221
      %s224 = sphi 0, %s223
      %s238 = sphi 0, %s224
      %s244 = sphi 0, %s246
      %s247 = sphi 0, %s244
      %s248 = sphi 0, %s247
      %s264 = sphi 0, %s248
    $region4: #{tpu_custom_call.1} parent=1 // loop_header_branch
      %22 = sbr.rel (%p20) target = $region8
    $region5: #{tpu_custom_call.1} parent=1 // loop_body
      %s24 = ssub.s32 %s19, 1
      %s25 = ssub.s32 %s19, 2
      %s26 = sadd.s32 %s19, 1
      %s27 = ssub.s32 %s19, %s26
      %p28 = scmp.eq.s32.totalorder %s27, 0
      %s30 = sadd.s32 %s29, 1
      %s31 = scalar_select %p28, %s29, %s30
      %p34 = pneg %p28
      %p35 = scmp.eq.s32.totalorder %s19, 1
      %p36 = por %p34, %p35
      %p37 = scmp.ne.s32.totalorder %s29, %s32
      %p38 = scmp.eq.s32.totalorder %s19, 0
      %p39 = por %p37, %p38
      %p40 = scmp.ne.s32.totalorder %s29, %s32
      %p41 = scmp.eq.s32.totalorder %s24, 1
      %p42 = por %p40, %p41
      %p43 = scmp.ne.s32.totalorder %s32, %s33
      %p44 = scmp.eq.s32.totalorder %s24, 0
      %p45 = por %p43, %p44
      %p46 = scmp.ne.s32.totalorder %s32, %s33
      %p47 = scmp.eq.s32.totalorder %s25, 1
      %p48 = por %p46, %p47
      %p50 = scmp.ne.s32.totalorder %s33, %s49
      %p51 = scmp.eq.s32.totalorder %s25, 0
      %p52 = por %p50, %p51
      %s54 = sadd.s32 %s53, 1
      %p57 = scmp.eq.s32.totalorder %s19, 1
      %p58 = scmp.ne.s32.totalorder %s53, %s55
      %p59 = scmp.eq.s32.totalorder %s19, 0
      %p60 = por %p58, %p59
      %p61 = scmp.ne.s32.totalorder %s53, %s55
      %p62 = scmp.eq.s32.totalorder %s24, 1
      %p63 = por %p61, %p62
      %p64 = scmp.ne.s32.totalorder %s55, %s56
      %p65 = scmp.eq.s32.totalorder %s24, 0
      %p66 = por %p64, %p65
      %p67 = scmp.ne.s32.totalorder %s55, %s56
      %p68 = scmp.eq.s32.totalorder %s25, 1
      %p69 = por %p67, %p68
      %p71 = scmp.ne.s32.totalorder %s56, %s70
      %p72 = scmp.eq.s32.totalorder %s25, 0
      %p73 = por %p71, %p72
      %s75 = sadd.s32 %s74, 1
      %p78 = scmp.eq.s32.totalorder %s19, 1
      %p79 = scmp.ne.s32.totalorder %s74, %s76
      %p80 = scmp.eq.s32.totalorder %s19, 0
      %p81 = por %p79, %p80
      %p82 = scmp.ne.s32.totalorder %s74, %s76
      %p83 = scmp.eq.s32.totalorder %s24, 1
      %p84 = por %p82, %p83
      %p85 = scmp.ne.s32.totalorder %s76, %s77
      %p86 = scmp.eq.s32.totalorder %s24, 0
      %p87 = por %p85, %p86
      %p88 = scmp.ne.s32.totalorder %s76, %s77
      %p89 = scmp.eq.s32.totalorder %s25, 1
      %p90 = por %p88, %p89
      %p92 = scmp.ne.s32.totalorder %s77, %s91
      %p93 = scmp.eq.s32.totalorder %s25, 0
      %p94 = por %p92, %p93
      %s96 = sadd.s32 %s95, 1
      %p99 = scmp.eq.s32.totalorder %s19, 1
      %p100 = scmp.ne.s32.totalorder %s95, %s97
      %p101 = scmp.eq.s32.totalorder %s19, 0
      %p102 = por %p100, %p101
      %p103 = scmp.ne.s32.totalorder %s95, %s97
      %p104 = scmp.eq.s32.totalorder %s24, 1
      %p105 = por %p103, %p104
      %p106 = scmp.ne.s32.totalorder %s97, %s98
      %p107 = scmp.eq.s32.totalorder %s24, 0
      %p108 = por %p106, %p107
      %p109 = scmp.ne.s32.totalorder %s97, %s98
      %p110 = scmp.eq.s32.totalorder %s25, 1
      %p111 = por %p109, %p110
      %p113 = scmp.ne.s32.totalorder %s98, %s112
      %p114 = scmp.eq.s32.totalorder %s25, 0
      %p115 = por %p113, %p114
      %s117 = sadd.s32 %s116, 1
      %p120 = scmp.eq.s32.totalorder %s19, 1
      %p121 = scmp.ne.s32.totalorder %s116, %s118
      %p122 = scmp.eq.s32.totalorder %s19, 0
      %p123 = por %p121, %p122
      %p124 = scmp.ne.s32.totalorder %s116, %s118
      %p125 = scmp.eq.s32.totalorder %s24, 1
      %p126 = por %p124, %p125
      %p127 = scmp.ne.s32.totalorder %s118, %s119
      %p128 = scmp.eq.s32.totalorder %s24, 0
      %p129 = por %p127, %p128
      %p130 = scmp.ne.s32.totalorder %s118, %s119
      %p131 = scmp.eq.s32.totalorder %s25, 1
      %p132 = por %p130, %p131
      %p134 = scmp.ne.s32.totalorder %s119, %s133
      %p135 = scmp.eq.s32.totalorder %s25, 0
      %p136 = por %p134, %p135
      %s138 = sadd.s32 %s137, 1
      %p141 = scmp.eq.s32.totalorder %s19, 1
      %p142 = scmp.ne.s32.totalorder %s137, %s139
      %p143 = scmp.eq.s32.totalorder %s19, 0
      %p144 = por %p142, %p143
      %p145 = scmp.ne.s32.totalorder %s137, %s139
      %p146 = scmp.eq.s32.totalorder %s24, 1
      %p147 = por %p145, %p146
      %p148 = scmp.ne.s32.totalorder %s139, %s140
      %p149 = scmp.eq.s32.totalorder %s24, 0
      %p150 = por %p148, %p149
      %p151 = scmp.ne.s32.totalorder %s139, %s140
      %p152 = scmp.eq.s32.totalorder %s25, 1
      %p153 = por %p151, %p152
      %p155 = scmp.ne.s32.totalorder %s140, %s154
      %p156 = scmp.eq.s32.totalorder %s25, 0
      %p157 = por %p155, %p156
      %s159 = sadd.s32 %s158, 1
      %p162 = scmp.eq.s32.totalorder %s19, 1
      %p163 = scmp.ne.s32.totalorder %s158, %s160
      %p164 = scmp.eq.s32.totalorder %s19, 0
      %p165 = por %p163, %p164
      %p166 = scmp.ne.s32.totalorder %s158, %s160
      %p167 = scmp.eq.s32.totalorder %s24, 1
      %p168 = por %p166, %p167
      %p169 = scmp.ne.s32.totalorder %s160, %s161
      %p170 = scmp.eq.s32.totalorder %s24, 0
      %p171 = por %p169, %p170
      %p172 = scmp.ne.s32.totalorder %s160, %s161
      %p173 = scmp.eq.s32.totalorder %s25, 1
      %p174 = por %p172, %p173
      %p176 = scmp.ne.s32.totalorder %s161, %s175
      %p177 = scmp.eq.s32.totalorder %s25, 0
      %p178 = por %p176, %p177
      %s180 = sadd.s32 %s179, 1
      %p183 = scmp.eq.s32.totalorder %s19, 1
      %p184 = scmp.ne.s32.totalorder %s179, %s181
      %p185 = scmp.eq.s32.totalorder %s19, 0
      %p186 = por %p184, %p185
      %p187 = scmp.ne.s32.totalorder %s179, %s181
      %p188 = scmp.eq.s32.totalorder %s24, 1
      %p189 = por %p187, %p188
      %p190 = scmp.ne.s32.totalorder %s181, %s182
      %p191 = scmp.eq.s32.totalorder %s24, 0
      %p192 = por %p190, %p191
      %p193 = scmp.ne.s32.totalorder %s181, %s182
      %p194 = scmp.eq.s32.totalorder %s25, 1
      %p195 = por %p193, %p194
      %p197 = scmp.ne.s32.totalorder %s182, %s196
      %p198 = scmp.eq.s32.totalorder %s25, 0
      %p199 = por %p197, %p198
      %s201 = sadd.s32 %s200, 1
      %p204 = scmp.eq.s32.totalorder %s19, 1
      %p205 = scmp.ne.s32.totalorder %s200, %s202
      %p206 = scmp.eq.s32.totalorder %s19, 0
      %p207 = por %p205, %p206
      %p208 = scmp.ne.s32.totalorder %s200, %s202
      %p209 = scmp.eq.s32.totalorder %s24, 1
      %p210 = por %p208, %p209
      %p211 = scmp.ne.s32.totalorder %s202, %s203
      %p212 = scmp.eq.s32.totalorder %s24, 0
      %p213 = por %p211, %p212
      %p214 = scmp.ne.s32.totalorder %s202, %s203
      %p215 = scmp.eq.s32.totalorder %s25, 1
      %p216 = por %p214, %p215
      %p218 = scmp.ne.s32.totalorder %s203, %s217
      %p219 = scmp.eq.s32.totalorder %s25, 0
      %p220 = por %p218, %p219
      %s222 = sadd.s32 %s221, 1
      %p225 = scmp.eq.s32.totalorder %s19, 1
      %p226 = scmp.ne.s32.totalorder %s221, %s223
      %p227 = scmp.eq.s32.totalorder %s19, 0
      %p228 = por %p226, %p227
      %p229 = scmp.ne.s32.totalorder %s221, %s223
      %p230 = scmp.eq.s32.totalorder %s24, 1
      %p231 = por %p229, %p230
      %p232 = scmp.ne.s32.totalorder %s223, %s224
      %p233 = scmp.eq.s32.totalorder %s24, 0
      %p234 = por %p232, %p233
      %p235 = scmp.ne.s32.totalorder %s223, %s224
      %p236 = scmp.eq.s32.totalorder %s25, 1
      %p237 = por %p235, %p236
      %p239 = scmp.ne.s32.totalorder %s224, %s238
      %p240 = scmp.eq.s32.totalorder %s25, 0
      %p241 = por %p239, %p240
      %s242 = ssub.s32 %s19, %s26
      %p243 = scmp.eq.s32.totalorder %s242, 0
      %s245 = sadd.s32 %s244, 1
      %s246 = scalar_select %p243, %s244, %s245
      %p249 = pneg %p243
      %p250 = scmp.eq.s32.totalorder %s19, 1
      %p251 = por %p249, %p250
      %p252 = scmp.ne.s32.totalorder %s244, %s247
      %p253 = scmp.eq.s32.totalorder %s19, 0
      %p254 = por %p252, %p253
      %p255 = scmp.ne.s32.totalorder %s244, %s247
      %p256 = scmp.eq.s32.totalorder %s24, 1
      %p257 = por %p255, %p256
      %p258 = scmp.ne.s32.totalorder %s247, %s248
      %p259 = scmp.eq.s32.totalorder %s24, 0
      %p260 = por %p258, %p259
      %p261 = scmp.ne.s32.totalorder %s247, %s248
      %p262 = scmp.eq.s32.totalorder %s25, 1
      %p263 = por %p261, %p262
      %p265 = scmp.ne.s32.totalorder %s248, %s264
      %p266 = scmp.eq.s32.totalorder %s25, 0
      %p267 = por %p265, %p266
      %p268 = scmp.le.s32.totalorder 1, %s19
      %p269 = scmp.lt.s32.totalorder %s19, 3
      %p270 = pnand %p268, %p269
      %p271 = pneg %p270
      // Predicated region
      $region9: #{tpu_custom_call.1} parent=5 // pred_check
        _
      $region10: #{tpu_custom_call.1} parent=5 // pred_check_branch
        %273 = sbr.rel (%p270) target = $region12
      $region11: #{tpu_custom_call.1} parent=5 // pred_region
        %s274 = ssub.s32 %s19, 1
        // Predicated region
        $region13: #{tpu_custom_call.1} parent=11 // pred_check
          %p275 = pneg %p66
        $region14: #{tpu_custom_call.1} parent=11 // pred_check_branch
          %277 = sbr.rel (%p275) target = $region16
        $region15: #{tpu_custom_call.1} parent=11 // pred_region
          _
        $region16: #{tpu_custom_call.1} parent=11 // pred_fallthru
          _
        // Predicated region
        $region17: #{tpu_custom_call.1} parent=11 // pred_check
          %p278 = pneg %p87
        $region18: #{tpu_custom_call.1} parent=11 // pred_check_branch
          %280 = sbr.rel (%p278) target = $region20
        $region19: #{tpu_custom_call.1} parent=11 // pred_region
          _
        $region20: #{tpu_custom_call.1} parent=11 // pred_fallthru
          _
        // Predicated region
        $region21: #{tpu_custom_call.1} parent=11 // pred_check
          %p281 = pneg %p108
        $region22: #{tpu_custom_call.1} parent=11 // pred_check_branch
          %283 = sbr.rel (%p281) target = $region24
        $region23: #{tpu_custom_call.1} parent=11 // pred_region
          _
        $region24: #{tpu_custom_call.1} parent=11 // pred_fallthru
          _
        // Predicated region
        $region25: #{tpu_custom_call.1} parent=11 // pred_check
          %p284 = pneg %p129
        $region26: #{tpu_custom_call.1} parent=11 // pred_check_branch
          %286 = sbr.rel (%p284) target = $region28
        $region27: #{tpu_custom_call.1} parent=11 // pred_region
          _
        $region28: #{tpu_custom_call.1} parent=11 // pred_fallthru
          _
        // Predicated region
        $region29: #{tpu_custom_call.1} parent=11 // pred_check
          %p287 = pneg %p150
        $region30: #{tpu_custom_call.1} parent=11 // pred_check_branch
          %289 = sbr.rel (%p287) target = $region32
        $region31: #{tpu_custom_call.1} parent=11 // pred_region
          _
        $region32: #{tpu_custom_call.1} parent=11 // pred_fallthru
          _
        // Predicated region
        $region33: #{tpu_custom_call.1} parent=11 // pred_check
          %p290 = pneg %p171
        $region34: #{tpu_custom_call.1} parent=11 // pred_check_branch
          %292 = sbr.rel (%p290) target = $region36
        $region35: #{tpu_custom_call.1} parent=11 // pred_region
          _
        $region36: #{tpu_custom_call.1} parent=11 // pred_fallthru
          _
        // Predicated region
        $region37: #{tpu_custom_call.1} parent=11 // pred_check
          %p293 = pneg %p192
        $region38: #{tpu_custom_call.1} parent=11 // pred_check_branch
          %295 = sbr.rel (%p293) target = $region40
        $region39: #{tpu_custom_call.1} parent=11 // pred_region
          _
        $region40: #{tpu_custom_call.1} parent=11 // pred_fallthru
          _
        // Predicated region
        $region41: #{tpu_custom_call.1} parent=11 // pred_check
          %p296 = pneg %p213
        $region42: #{tpu_custom_call.1} parent=11 // pred_check_branch
          %298 = sbr.rel (%p296) target = $region44
        $region43: #{tpu_custom_call.1} parent=11 // pred_region
          _
        $region44: #{tpu_custom_call.1} parent=11 // pred_fallthru
          _
        // Predicated region
        $region45: #{tpu_custom_call.1} parent=11 // pred_check
          %p299 = pneg %p234
        $region46: #{tpu_custom_call.1} parent=11 // pred_check_branch
          %301 = sbr.rel (%p299) target = $region48
        $region47: #{tpu_custom_call.1} parent=11 // pred_region
          _
        $region48: #{tpu_custom_call.1} parent=11 // pred_fallthru
          _
      $region12: #{tpu_custom_call.1} parent=5 // pred_fallthru
        _
      %p302 = scmp.lt.s32.totalorder %s19, 2
      // Predicated region
      $region49: #{tpu_custom_call.1} parent=5 // pred_check
        %p303 = pneg %p302
      $region50: #{tpu_custom_call.1} parent=5 // pred_check_branch
        %305 = sbr.rel (%p303) target = $region52
      $region51: #{tpu_custom_call.1} parent=5 // pred_region
        // Predicated region
        $region53: #{tpu_custom_call.1} parent=51 // pred_check
          %p306 = pneg %p39
        $region54: #{tpu_custom_call.1} parent=51 // pred_check_branch
          %308 = sbr.rel (%p306) target = $region56
        $region55: #{tpu_custom_call.1} parent=51 // pred_region
          %s309 = smul.u32 4, %s19
          %p310 = scmp.lt.s32.totalorder %s309, 7
          %s311 = scalar_select %p310, %s309, 7
          %s312 = smul.addr %s311, 4
          %s313 = scalar_lea.vmem %s0, %s312
          %s314 = smul.u32 4, %s19
        $region56: #{tpu_custom_call.1} parent=51 // pred_fallthru
          _
      $region52: #{tpu_custom_call.1} parent=5 // pred_fallthru
        _
      %p315 = scmp.le.s32.totalorder 1, %s19
      %p316 = scmp.lt.s32.totalorder %s19, 3
      %p317 = pnand %p315, %p316
      %p318 = pneg %p317
      // Predicated region
      $region57: #{tpu_custom_call.1} parent=5 // pred_check
        _
      $region58: #{tpu_custom_call.1} parent=5 // pred_check_branch
        %320 = sbr.rel (%p317) target = $region60
      $region59: #{tpu_custom_call.1} parent=5 // pred_region
        %s321 = ssub.s32 %s19, 1
        %s322 = smul.u32 4, %s24
        %p323 = scmp.lt.s32.totalorder %s322, 7
        %s324 = scalar_select %p323, %s322, 7
        %s325 = smul.addr %s324, 4
        %s326 = scalar_lea.vmem %s0, %s325
        %p327 = pneg %p45
        %p328 = pneg %p42
        %p329 = pneg %p66
        %p330 = pneg %p63
        %p331 = pneg %p87
        %p332 = pneg %p84
        %p333 = pneg %p108
        %p334 = pneg %p105
        %p335 = pneg %p129
        %p336 = pneg %p126
        %p337 = pneg %p150
        %p338 = pneg %p147
        %p339 = pneg %p171
        %p340 = pneg %p168
        %p341 = pneg %p192
        %p342 = pneg %p189
        %p343 = pneg %p213
        %p344 = pneg %p210
        %p345 = pneg %p234
        %p346 = pneg %p231
        %p347 = pneg %p260
        %p348 = pneg %p257
        %s349 = sand.u32 %s247, 1
        %s350 = scalar_lea.sflag [#allocation3], %s349
        %s351 = sand.u32 %s247, 1
        %s352 = smul.addr %s351, 16
        %s353 = scalar_lea.vmem [#allocation2], %s352
        %s354 = smul.u32 4, %s24
        %p355 = scmp.lt.s32.totalorder %s354, 7
        %s356 = scalar_select %p355, %s354, 7
        %s357 = smul.addr %s356, 4
        %s358 = scalar_lea.vmem %s0, %s357
        %s359 = smul.u32 4, %s24
        %s360 = smul.u32 4, %s24
        %v362 = vld [vmem:[%s358] sm:$0xf]
        %v363 = vld [vmem:[%s358 + $0x4] sm:$0xf]
        %v364 = vld [vmem:[%s358 + $0x8] sm:$0xf]
        %v365 = vld [vmem:[%s358 + $0xc] sm:$0xf]
        %v366 = vld [vmem:[%s1] sm:$0xf]
        %v367 = vld [vmem:[%s1 + $0x4] sm:$0xf]
        %v368 = vld [vmem:[%s1 + $0x8] sm:$0xf]
        %v369 = vld [vmem:[%s1 + $0xc] sm:$0xf]
        %v370 = vld [vmem:[%s1 + $0x10] sm:$0xf]
        %v371 = vld [vmem:[%s1 + $0x14] sm:$0xf]
        %v372 = vld [vmem:[%s1 + $0x18] sm:$0xf]
        %v373 = vld [vmem:[%s1 + $0x1c] sm:$0xf]
        %v378 = vunpack.c.l.b16 %v362
        %v379 = vunpack.c.l.b16 %v363
        %v380 = vunpack.c.l.b16 %v364
        %v381 = vunpack.c.l.b16 %v365
        %v382 = vpack.c.b16 %v379, %v378
        %v383 = vpack.c.b16 %v381, %v380
        %v392 = vunpack.c.l.b16 %v366
        %v393 = vunpack.c.l.b16 %v367
        %v394 = vunpack.c.l.b16 %v368
        %v395 = vunpack.c.l.b16 %v369
        %v396 = vunpack.c.l.b16 %v370
        %v397 = vunpack.c.l.b16 %v371
        %v398 = vunpack.c.l.b16 %v372
        %v399 = vunpack.c.l.b16 %v373
        %v400 = vpack.c.b16 %v393, %v392
        %v401 = vpack.c.b16 %v395, %v394
        %v402 = vpack.c.b16 %v397, %v396
        %v403 = vpack.c.b16 %v399, %v398
        %vm408 = vcmask 523264
        %v410 = vsel %vm408, %v382, 0
        %v413 = vsel %vm408, %v383, 0
        %415 = vmatpush.bf16.msra.mxu0 0
        %416 = vmatpush.bf16.msra.mxu0 0
        %417 = vmatpush.bf16.msra.mxu0 0
        %418 = vmatpush.bf16.msra.mxu0 0
        %419 = vmatpush.bf16.msra.mxu0 %v403
        %420 = vmatpush.bf16.msra.mxu0 %v402
        %421 = vmatpush.bf16.msra.mxu0 %v401
        %422 = vmatpush.bf16.msra.mxu0 %v400
        %423 = vmatmul.bf16.gmra.mxu0 %v410
        %v424 = vpop.f32.mrf.mxu0
        %v425 = vadd.f32 0.0, %v424
        %v426 = vpop.f32.mrf.mxu0
        %v427 = vadd.f32 0.0, %v426
        %428 = vmatmul.bf16.gmra.mxu0 %v413
        %v429 = vpop.f32.mrf.mxu0
        %v430 = vadd.f32 0.0, %v429
        %v431 = vpop.f32.mrf.mxu0
        %v432 = vadd.f32 0.0, %v431
        %433 = vdwg.mxu0
        %v434 = vpack.c.bf16 %v427, %v425
        %v435 = vpack.c.bf16 %v432, %v430
        %v436 = vld [vmem:[%s2] sm:$0xf]
        %v437 = vld [vmem:[%s2 + $0x4] sm:$0xf]
        %v438 = vld [vmem:[%s3] sm:$0x1]
        %v440 = vperm.slane %v438, 0
        %v444 = vunpack.c.l.b16 %v436
        %v445 = vunpack.c.l.b16 %v437
        %v446 = vpack.c.b16 %v445, %v444
        %vm448 = vcmask 130048
        %v450 = vsel %vm448, %v434, 0
        %v453 = vsel %vm448, %v435, 0
        %455 = vmatpush.bf16.msra.mxu0 0
        %456 = vmatpush.bf16.msra.mxu0 0
        %457 = vmatpush.bf16.msra.mxu0 0
        %458 = vmatpush.bf16.msra.mxu0 0
        %459 = vmatpush.bf16.msra.mxu0 0
        %460 = vmatpush.bf16.msra.mxu0 0
        %461 = vmatpush.bf16.msra.mxu0 0
        %462 = vmatpush.bf16.msra.mxu0 %v446
        %463 = vmatmul.bf16.gmra.mxu0 %v450
        %v464 = vpop.f32.mrf.mxu0
        %v465 = vadd.f32 %v440, %v464
        %v466 = vpop.f32.mrf.mxu0
        %v467 = vadd.f32 %v440, %v466
        %468 = vmatmul.bf16.gmra.mxu0 %v453
        %v469 = vpop.f32.mrf.mxu0
        %v470 = vadd.f32 %v440, %v469
        %v471 = vpop.f32.mrf.mxu0
        %v472 = vadd.f32 %v440, %v471
        %473 = vdwg.mxu0
        %v474 = vmax.f32 %v465, 0.0
        %v475 = vmax.f32 %v467, 0.0
        %v476 = vmax.f32 %v470, 0.0
        %v477 = vmax.f32 %v472, 0.0
        %v478 = vpack.c.bf16 %v475, %v474
        %v479 = vpack.c.bf16 %v477, %v476
        %v480 = vld [vmem:[%s4] sm:$0xf]
        %v481 = vld [vmem:[%s4 + $0x4] sm:$0xf]
        %v482 = vld [vmem:[%s4 + $0x8] sm:$0xf]
        %v483 = vld [vmem:[%s4 + $0xc] sm:$0xf]
        %v484 = vld [vmem:[%s4 + $0x10] sm:$0xf]
        %v485 = vld [vmem:[%s4 + $0x14] sm:$0xf]
        %v486 = vld [vmem:[%s4 + $0x18] sm:$0xf]
        %v487 = vld [vmem:[%s4 + $0x1c] sm:$0xf]
        %v488 = vld [vmem:[%s5] sm:$0x1]
        %v490 = vperm.slane %v488, 0
        %v500 = vunpack.c.l.b16 %v480
        %v501 = vunpack.c.l.b16 %v481
        %v502 = vunpack.c.l.b16 %v482
        %v503 = vunpack.c.l.b16 %v483
        %v504 = vunpack.c.l.b16 %v484
        %v505 = vunpack.c.l.b16 %v485
        %v506 = vunpack.c.l.b16 %v486
        %v507 = vunpack.c.l.b16 %v487
        %v508 = vpack.c.b16 %v501, %v500
        %v509 = vpack.c.b16 %v503, %v502
        %v510 = vpack.c.b16 %v505, %v504
        %v511 = vpack.c.b16 %v507, %v506
        %v517 = vsel %vm408, %v478, 0
        %v520 = vsel %vm408, %v479, 0
        %522 = vmatpush.bf16.msra.mxu0 0
        %523 = vmatpush.bf16.msra.mxu0 0
        %524 = vmatpush.bf16.msra.mxu0 0
        %525 = vmatpush.bf16.msra.mxu0 0
        %526 = vmatpush.bf16.msra.mxu0 %v511
        %527 = vmatpush.bf16.msra.mxu0 %v510
        %528 = vmatpush.bf16.msra.mxu0 %v509
        %529 = vmatpush.bf16.msra.mxu0 %v508
        %530 = vmatmul.bf16.gmra.mxu0 %v517
        %v531 = vpop.f32.mrf.mxu0
        %v532 = vadd.f32 %v490, %v531
        %v533 = vpop.f32.mrf.mxu0
        %v534 = vadd.f32 %v490, %v533
        %535 = vmatmul.bf16.gmra.mxu0 %v520
        %v536 = vpop.f32.mrf.mxu0
        %v537 = vadd.f32 %v490, %v536
        %v538 = vpop.f32.mrf.mxu0
        %v539 = vadd.f32 %v490, %v538
        %540 = vdwg.mxu0
        %v541 = vmax.f32 %v532, 0.0
        %v542 = vmax.f32 %v534, 0.0
        %v543 = vmax.f32 %v537, 0.0
        %v544 = vmax.f32 %v539, 0.0
        %v545 = vpack.c.bf16 %v542, %v541
        %v546 = vpack.c.bf16 %v544, %v543
        %v547 = vld [vmem:[%s6] sm:$0xf]
        %v548 = vld [vmem:[%s6 + $0x4] sm:$0xf]
        %v549 = vld [vmem:[%s6 + $0x8] sm:$0xf]
        %v550 = vld [vmem:[%s6 + $0xc] sm:$0xf]
        %v551 = vld [vmem:[%s7] sm:$0x1]
        %v553 = vperm.slane %v551, 0
        %v559 = vunpack.c.l.b16 %v547
        %v560 = vunpack.c.l.b16 %v548
        %v561 = vunpack.c.l.b16 %v549
        %v562 = vunpack.c.l.b16 %v550
        %v563 = vpack.c.b16 %v560, %v559
        %v564 = vpack.c.b16 %v562, %v561
        %vm567 = vcmask 261120
        %v569 = vsel %vm567, %v545, 0
        %v572 = vsel %vm567, %v546, 0
        %574 = vmatpush.bf16.msra.mxu0 0
        %575 = vmatpush.bf16.msra.mxu0 0
        %576 = vmatpush.bf16.msra.mxu0 0
        %577 = vmatpush.bf16.msra.mxu0 0
        %578 = vmatpush.bf16.msra.mxu0 0
        %579 = vmatpush.bf16.msra.mxu0 0
        %580 = vmatpush.bf16.msra.mxu0 %v564
        %581 = vmatpush.bf16.msra.mxu0 %v563
        %582 = vmatmul.bf16.gmra.mxu0 %v569
        %v583 = vpop.f32.mrf.mxu0
        %v584 = vadd.f32 %v553, %v583
        %v585 = vpop.f32.mrf.mxu0
        %v586 = vadd.f32 %v553, %v585
        %587 = vmatmul.bf16.gmra.mxu0 %v572
        %v588 = vpop.f32.mrf.mxu0
        %v589 = vadd.f32 %v553, %v588
        %v590 = vpop.f32.mrf.mxu0
        %v591 = vadd.f32 %v553, %v590
        %592 = vdwg.mxu0
        %v593 = vmax.f32 %v584, 0.0
        %v594 = vmax.f32 %v586, 0.0
        %v595 = vmax.f32 %v589, 0.0
        %v596 = vmax.f32 %v591, 0.0
        %v597 = vpack.c.bf16 %v594, %v593
        %v598 = vpack.c.bf16 %v596, %v595
        %v599 = vld [vmem:[%s8] sm:$0xf]
        %v600 = vld [vmem:[%s8 + $0x4] sm:$0xf]
        %v601 = vld [vmem:[%s9] sm:$0x1]
        %v603 = vperm.slane %v601, 0
        %v607 = vunpack.c.l.b16 %v599
        %v608 = vunpack.c.l.b16 %v600
        %v609 = vpack.c.b16 %v608, %v607
        %v612 = vsel %vm448, %v597, 0
        %v615 = vsel %vm448, %v598, 0
        %617 = vmatpush.bf16.msra.mxu0 0
        %618 = vmatpush.bf16.msra.mxu0 0
        %619 = vmatpush.bf16.msra.mxu0 0
        %620 = vmatpush.bf16.msra.mxu0 0
        %621 = vmatpush.bf16.msra.mxu0 0
        %622 = vmatpush.bf16.msra.mxu0 0
        %623 = vmatpush.bf16.msra.mxu0 0
        %624 = vmatpush.bf16.msra.mxu0 %v609
        %625 = vmatmul.bf16.gmra.mxu0 %v612
        %v626 = vpop.f32.mrf.mxu0
        %v627 = vadd.f32 %v603, %v626
        %v628 = vpop.f32.mrf.mxu0
        %v629 = vadd.f32 %v603, %v628
        %630 = vmatmul.bf16.gmra.mxu0 %v615
        %v631 = vpop.f32.mrf.mxu0
        %v632 = vadd.f32 %v603, %v631
        %v633 = vpop.f32.mrf.mxu0
        %v634 = vadd.f32 %v603, %v633
        %635 = vdwg.mxu0
        %v636 = vpack.c.bf16 %v627, %v627
        %v637 = vpack.c.bf16 %v629, %v629
        %v638 = vpack.c.bf16 %v632, %v632
        %v639 = vpack.c.bf16 %v634, %v634
        %640 = vst [vmem:[%s353] sm:$0xf] %v636
        %641 = vst [vmem:[%s353 + $0x4] sm:$0xf] %v637
        %642 = vst [vmem:[%s353 + $0x8] sm:$0xf] %v638
        %643 = vst [vmem:[%s353 + $0xc] sm:$0xf] %v639
        %s644 = sand.u32 %s247, 1
        %s645 = scalar_lea.sflag [#allocation3], %s644
        %s646 = sand.u32 %s247, 1
        %s647 = smul.addr %s646, 16
        %s648 = scalar_lea.vmem [#allocation2], %s647
        // Predicated region
        $region61: #{tpu_custom_call.1} parent=59 // pred_check
          %p649 = pneg %p257
        $region62: #{tpu_custom_call.1} parent=59 // pred_check_branch
          %651 = sbr.rel (%p649) target = $region64
        $region63: #{tpu_custom_call.1} parent=59 // pred_region
          %s652 = smul.u32 4, %s24
          %654 = vsyncadd %s645, 0
          %s655 = smul.addr %s652, 4
          %s656 = scalar_lea.hbm %s10, %s655
          %s657 = sshll.u32 %s648, 4
          %s658 = int_to_ptr.vmem [resolvable:$true] %s657
          %s659 = sshll.u32 %s656, 4
          %s660 = int_to_ptr.hbm [resolvable:$true] %s659
          %665 = dma.vmem_to_hbm [thread:$0]  %s658, 256, %s660, %s645, 64, 64, 4
        $region64: #{tpu_custom_call.1} parent=59 // pred_fallthru
          _
      $region60: #{tpu_custom_call.1} parent=5 // pred_fallthru
        _
      %p666 = scmp.le.s32.totalorder 2, %s19
      // Predicated region
      $region65: #{tpu_custom_call.1} parent=5 // pred_check
        %p667 = pneg %p666
      $region66: #{tpu_custom_call.1} parent=5 // pred_check_branch
        %669 = sbr.rel (%p667) target = $region68
      $region67: #{tpu_custom_call.1} parent=5 // pred_region
        %s670 = ssub.s32 %s19, 2
        // Predicated region
        $region69: #{tpu_custom_call.1} parent=67 // pred_check
          %p671 = pneg %p263
        $region70: #{tpu_custom_call.1} parent=67 // pred_check_branch
          %673 = sbr.rel (%p671) target = $region72
        $region71: #{tpu_custom_call.1} parent=67 // pred_region
          %s674 = sand.u32 %s248, 1
          %s675 = scalar_lea.sflag [#allocation3], %s674
          %s676 = sand.u32 %s248, 1
          %s677 = smul.addr %s676, 16
          %s678 = scalar_lea.vmem [#allocation2], %s677
          %680 = dma.done %s675, 256
        $region72: #{tpu_custom_call.1} parent=67 // pred_fallthru
          _
      $region68: #{tpu_custom_call.1} parent=5 // pred_fallthru
        _
    $region6: #{tpu_custom_call.1} parent=1 // loop_footer
      %s23 = sadd.s32 1, %s19
    $region7: #{tpu_custom_call.1} parent=1 // loop_footer_branch
      %18 = sbr.rel target = $region3
    $region8: #{tpu_custom_call.1} parent=1 // loop_exit
      _
    %681 = vsyncpa [#allocation3], 1
    %s682 = scalar_lea.sflag [#allocation3], 1
    %683 = vsyncpa %s682, 1

</llo_original>
